<compile_context>
chip_gen: v7x
topology: tpu7x:2x2x1
jax: 0.10.0
libtpu: 0.0.40
codegen_flags: <defaults>
</compile_context>

<pallas_src>
import jax
import jax.numpy as jnp
from jax.experimental import pallas as pl
from jax.experimental.pallas import tpu as pltpu

LANES = 128            # lane width of a vreg; weight tiles are padded to this
BIAS_ROW = LANES - 1   # reserved row inside each weight tile that holds the bias
_SUB_ROWS = 128        # rows processed per inner iteration (keeps live vregs small)


def _round_up(n, m):
    return ((n + m - 1) // m) * m


def _choose_tm(batch):
    """Pick the batch tile size.

    Small batches -> one 8-aligned tile (no grid-step overhead, minimal padding).
    Large batches -> a tile from {128,256,512,1024} chosen to minimize padded
    rows, preferring larger tiles to amortize the ~0.35us per-grid-step cost,
    while keeping >= 2 grid steps so v7x can split the batch axis across cores.
    """
    if batch <= 128:
        return _round_up(max(batch, 1), 8)
    cands = [tm for tm in (1024, 512, 256, 128)
             if _round_up(batch, tm) // tm >= 2]
    if not cands:
        cands = [128]
    return min(cands, key=lambda tm: (_round_up(batch, tm) - batch, -tm))


def _qnet_kernel(x_ref, p_ref, out_ref):
    """One batch tile through the whole 3-layer MLP.

    x_ref:   (TM, input_size)   real (un-padded) input lanes
    p_ref:   (3, 128, 128)      per-layer weight tiles, bias stored in row BIAS_ROW
    out_ref: (TM, output_size)  narrow output tile (only real lanes are written)
    """
    in_size = x_ref.shape[-1]
    out_size = out_ref.shape[-1]
    tm = x_ref.shape[0]
    sub = min(tm, _SUB_ROWS)
    n_sub = tm // sub

    def compute(r0):
        x = x_ref[pl.ds(r0, sub), :]                                   # (sub, in)

        # Layer 1: only the first in_size weight rows participate (static ref
        # slice); the bias is added explicitly from the reserved row.
        h = jnp.dot(x, p_ref[0, :in_size, :],
                    preferred_element_type=jnp.float32)
        h = jnp.maximum(h + p_ref[0, BIAS_ROW:BIAS_ROW + 1, :], 0.0)

        # Layers 2/3 use the full 128x128 tile.  Lane BIAS_ROW of h is always 0
        # (zero-padded weight columns + zero-padded bias + ReLU), so the bias row
        # inside the tile contributes nothing to the matmul; the bias is then
        # added explicitly.
        h = jnp.dot(h, p_ref[1], preferred_element_type=jnp.float32)
        h = jnp.maximum(h + p_ref[1, BIAS_ROW:BIAS_ROW + 1, :], 0.0)

        o = jnp.dot(h, p_ref[2], preferred_element_type=jnp.float32)
        o = o + p_ref[2, BIAS_ROW:BIAS_ROW + 1, :]

        out_ref[pl.ds(r0, sub), :] = o[:, :out_size].astype(out_ref.dtype)

    if n_sub == 1:
        compute(0)
    else:
        @pl.loop(0, n_sub)
        def _(s):
            compute(pl.multiple_of(s * sub, sub))


def pack_params(params, input_size, output_size):
    """Pack w1,b1,w2,b2,w3,b3 into a single zero-padded (3, 128, 128) f32 slab."""
    dims_in = (input_size, 10, 20)
    dims_out = (10, 20, output_size)
    assert max(dims_in) <= BIAS_ROW and max(dims_out) <= LANES, \
        "feature dims must fit in one 128-lane tile (bias row reserved)"
    slab = jnp.zeros((3, LANES, LANES), jnp.float32)
    for layer in range(3):
        w = params[f"w{layer + 1}"].astype(jnp.float32)                 # (in, out)
        b = params[f"b{layer + 1}"].astype(jnp.float32).reshape(-1)     # (out,)
        slab = slab.at[layer, :dims_in[layer], :dims_out[layer]].set(w)
        slab = slab.at[layer, BIAS_ROW, :dims_out[layer]].set(b)
    return slab


def q_network_forward(x, packed_params, output_size):
    """x: (B, input_size) float32. packed_params: (3, 128, 128) slab from pack_params."""
    B, in_size = x.shape
    TM = _choose_tm(B)
    B_pad = _round_up(B, TM)

    x = x.astype(jnp.float32)
    if B_pad != B:
        # Only pad batch rows (never lanes), and only when B isn't tile-aligned.
        x = jnp.zeros((B_pad, in_size), jnp.float32).at[:B].set(x)

    out = pl.pallas_call(
        _qnet_kernel,
        out_shape=jax.ShapeDtypeStruct((B_pad, output_size), jnp.float32),
        grid_spec=pltpu.PrefetchScalarGridSpec(
            num_scalar_prefetch=0,
            grid=(B_pad // TM,),
            in_specs=[
                # Narrow x tile: last dim equals the full array dim, so the
                # (8,128) rule is satisfied without lane padding.
                pl.BlockSpec((TM, in_size), lambda i: (i, 0)),
                # Constant block index: the 192 KB parameter slab stays resident
                # in VMEM across all batch tiles.
                pl.BlockSpec((3, LANES, LANES), lambda i: (0, 0, 0)),
            ],
            # Narrow output: only output_size lanes per row go back to HBM.
            out_specs=pl.BlockSpec((TM, output_size), lambda i: (i, 0)),
        ),
        compiler_params=pltpu.CompilerParams(
            dimension_semantics=("parallel",)),
        # TODO(synk): on v7x with >= 2 grid steps, try
        # dimension_semantics=(pltpu.CORE_PARALLEL,) to force both TensorCores.
    )(x, packed_params)

    if B_pad != B:
        out = out[:B]
    return out


def init_params(key, input_size, output_size):
    """Deterministic init mimicking nn.Linear's U(-1/sqrt(fan_in), 1/sqrt(fan_in))."""
    dims = [(input_size, 10), (10, 20), (20, output_size)]
    params = {}
    for i, (fan_in, fan_out) in enumerate(dims, start=1):
        key, kw, kb = jax.random.split(key, 3)
        bound = 1.0 / jnp.sqrt(float(fan_in))
        # stored transposed relative to PyTorch: (in, out), so forward is x @ W + b
        params[f"w{i}"] = jax.random.uniform(
            kw, (fan_in, fan_out), jnp.float32, minval=-bound, maxval=bound)
        params[f"b{i}"] = jax.random.uniform(
            kb, (1, fan_out), jnp.float32, minval=-bound, maxval=bound)
    return params


def _reference_forward(x, p):
    h1 = jnp.maximum(x @ p["w1"] + p["b1"], 0.0)
    h2 = jnp.maximum(h1 @ p["w2"] + p["b2"], 0.0)
    return h2 @ p["w3"] + p["b3"]


if __name__ == "__main__":
    # Small shapes consistent with a chain-MDP Q-network: input_size = number of
    # states (one-hot), output_size = number of actions.
    input_size = 8
    output_size = 2
    batch = 2

    key = jax.random.PRNGKey(0)
    key, kx = jax.random.split(key)
    params = init_params(key, input_size, output_size)
    packed = pack_params(params, input_size, output_size)   # built once, reused per call
    x = jax.random.normal(kx, (batch, input_size), dtype=jnp.float32)

    # Single jit so pad (if any) + pallas_call + slice dispatch as one program.
    fwd = jax.jit(q_network_forward, static_argnums=(2,))
    out = jax.block_until_ready(fwd(x, packed, output_size))

    ref = _reference_forward(x, params)
    assert out.shape == (batch, output_size)
    assert jnp.allclose(out, ref, atol=1e-5, rtol=1e-5)

    print("KERNEL_OK")
</pallas_src>

<mosaic_0001>
module attributes {stable_mosaic.version = 11 : i64} {
  func.func @_qnet_kernel(%arg0: i32, %arg1: memref<8x8xf32, #tpu.memory_space<vmem>>, %arg2: memref<3x128x128xf32, #tpu.memory_space<vmem>>, %arg3: memref<8x2xf32, #tpu.memory_space<vmem>>) attributes {dimension_semantics = [#tpu.dimension_semantics<parallel>], iteration_bounds = array<i64: 1>, scalar_prefetch = 0 : i64, scratch_operands = 0 : i64, tpu.core_type = #tpu.core_type<tc>, window_params = [{transform_indices = @transform_0, window_bounds = array<i64: 8, 8>}, {pipeline_mode = #tpu.pipeline_mode<synchronous>, transform_indices = @transform_1, window_bounds = array<i64: 3, 128, 128>}, {transform_indices = @transform_2, window_bounds = array<i64: 8, 2>}]} {
    %c0 = arith.constant 0 : index
    %c0_0 = arith.constant 0 : index
    %0 = vector.load %arg1[%c0, %c0_0] : memref<8x8xf32, #tpu.memory_space<vmem>>, vector<8x8xf32>
    %c0_1 = arith.constant 0 : index
    %c0_2 = arith.constant 0 : index
    %c0_3 = arith.constant 0 : index
    %1 = vector.load %arg2[%c0_1, %c0_2, %c0_3] : memref<3x128x128xf32, #tpu.memory_space<vmem>>, vector<1x8x128xf32>
    %2 = vector.shape_cast %1 : vector<1x8x128xf32> to vector<8x128xf32>
    %cst = arith.constant dense<0.000000e+00> : vector<8x128xf32>
    %3 = tpu.matmul %0, %2, %cst {dimension_numbers = #tpu.dot_dimension_numbers<[1], [0], [0], [1], [0, 0, 1, 1], [], []>} : vector<8x8xf32>, vector<8x128xf32>, vector<8x128xf32> -> vector<8x128xf32>
    %c0_4 = arith.constant 0 : index
    %c127 = arith.constant 127 : index
    %c0_5 = arith.constant 0 : index
    %4 = vector.load %arg2[%c0_4, %c127, %c0_5] : memref<3x128x128xf32, #tpu.memory_space<vmem>>, vector<1x1x128xf32>
    %5 = vector.shape_cast %4 : vector<1x1x128xf32> to vector<1x128xf32>
    %6 = vector.broadcast %5 : vector<1x128xf32> to vector<8x128xf32>
    %7 = arith.addf %3, %6 : vector<8x128xf32>
    %cst_6 = arith.constant 0.000000e+00 : f32
    %8 = vector.broadcast %cst_6 : f32 to vector<8x128xf32>
    %9 = arith.maximumf %7, %8 : vector<8x128xf32>
    %c1 = arith.constant 1 : index
    %c0_7 = arith.constant 0 : index
    %c0_8 = arith.constant 0 : index
    %10 = vector.load %arg2[%c1, %c0_7, %c0_8] : memref<3x128x128xf32, #tpu.memory_space<vmem>>, vector<1x128x128xf32>
    %11 = vector.shape_cast %10 : vector<1x128x128xf32> to vector<128x128xf32>
    %cst_9 = arith.constant dense<0.000000e+00> : vector<8x128xf32>
    %12 = tpu.matmul %9, %11, %cst_9 {dimension_numbers = #tpu.dot_dimension_numbers<[1], [0], [0], [1], [0, 0, 1, 1], [], []>} : vector<8x128xf32>, vector<128x128xf32>, vector<8x128xf32> -> vector<8x128xf32>
    %c1_10 = arith.constant 1 : index
    %c127_11 = arith.constant 127 : index
    %c0_12 = arith.constant 0 : index
    %13 = vector.load %arg2[%c1_10, %c127_11, %c0_12] : memref<3x128x128xf32, #tpu.memory_space<vmem>>, vector<1x1x128xf32>
    %14 = vector.shape_cast %13 : vector<1x1x128xf32> to vector<1x128xf32>
    %15 = vector.broadcast %14 : vector<1x128xf32> to vector<8x128xf32>
    %16 = arith.addf %12, %15 : vector<8x128xf32>
    %cst_13 = arith.constant 0.000000e+00 : f32
    %17 = vector.broadcast %cst_13 : f32 to vector<8x128xf32>
    %18 = arith.maximumf %16, %17 : vector<8x128xf32>
    %c2 = arith.constant 2 : index
    %c0_14 = arith.constant 0 : index
    %c0_15 = arith.constant 0 : index
    %19 = vector.load %arg2[%c2, %c0_14, %c0_15] : memref<3x128x128xf32, #tpu.memory_space<vmem>>, vector<1x128x128xf32>
    %20 = vector.shape_cast %19 : vector<1x128x128xf32> to vector<128x128xf32>
    %cst_16 = arith.constant dense<0.000000e+00> : vector<8x128xf32>
    %21 = tpu.matmul %18, %20, %cst_16 {dimension_numbers = #tpu.dot_dimension_numbers<[1], [0], [0], [1], [0, 0, 1, 1], [], []>} : vector<8x128xf32>, vector<128x128xf32>, vector<8x128xf32> -> vector<8x128xf32>
    %c2_17 = arith.constant 2 : index
    %c127_18 = arith.constant 127 : index
    %c0_19 = arith.constant 0 : index
    %22 = vector.load %arg2[%c2_17, %c127_18, %c0_19] : memref<3x128x128xf32, #tpu.memory_space<vmem>>, vector<1x1x128xf32>
    %23 = vector.shape_cast %22 : vector<1x1x128xf32> to vector<1x128xf32>
    %24 = vector.broadcast %23 : vector<1x128xf32> to vector<8x128xf32>
    %25 = arith.addf %21, %24 : vector<8x128xf32>
    %26 = vector.extract_strided_slice %25 {offsets = [0, 0], sizes = [8, 2], strides = [1, 1]} : vector<8x128xf32> to vector<8x2xf32>
    %c0_20 = arith.constant 0 : index
    %c0_21 = arith.constant 0 : index
    %27 = vector.load %arg3[%c0_20, %c0_21] : memref<8x2xf32, #tpu.memory_space<vmem>>, vector<8x2xf32>
    tpu.vector_store %arg3[%c0_20, %c0_21], %26 {strides = array<i32>} : memref<8x2xf32, #tpu.memory_space<vmem>>, vector<8x2xf32>,
    return
  }
  func.func @transform_0(%arg0: i32) -> (i32, i32) {
    %c0_i32 = arith.constant 0 : i32
    %c0_i32_0 = arith.constant 0 : i32
    return %arg0, %c0_i32 : i32, i32
  }
  func.func @transform_1(%arg0: i32) -> (i32, i32, i32) {
    %c0_i32 = arith.constant 0 : i32
    %c0_i32_0 = arith.constant 0 : i32
    %c0_i32_1 = arith.constant 0 : i32
    %c0_i32_2 = arith.constant 0 : i32
    return %c0_i32, %c0_i32_0, %c0_i32_1 : i32, i32, i32
  }
  func.func @transform_2(%arg0: i32) -> (i32, i32) {
    %c0_i32 = arith.constant 0 : i32
    %c0_i32_0 = arith.constant 0 : i32
    return %arg0, %c0_i32 : i32, i32
  }
}

</mosaic_0001>

<llo_original>
// kernel: q_network_forward.1
$region0: #{q_network_forward.1}
  #allocation0 [shape = 'u32[]', space=smem, size = 0x4, offset = 0x4, fixed_abs, tag = 'smem constant byte address 0x4 - core index']
  #allocation1 [shape = 'u32[144,128]{1,0:T(1,128)}', space=vmem, size = 0x12000, scoped, tag = 'internal scratch']
  %s0 = inlined_call_operand.vmem [shape: f32[8,8], index: 0, kind: input, shape index: {}]
  %s1 = inlined_call_operand.hbm [shape: f32[3,128,128], index: 1, kind: input, shape index: {}]
  %s2 = inlined_call_operand.vmem [shape: f32[8,2], index: 2, kind: output, shape index: {}]
  %s3 = sld [smem:[#allocation0]]
  $region22: #{q_network_forward.1} parent=0
    _
  %s5 = ssub.s32 1, %s3
  %s6 = scalar_select 0, %s5, %s3
  $region1: #{q_network_forward.1} parent=0
    #allocation2 [shape = 'u8[196608]{0}', space=vmem, size = 0x30000, scoped, tag = 'input window, operand 1, single buffered']
    #allocation3 [shape = 's32[1]{0}', space=sflag, size = 0x4, scoped, tag = 'scoped memory for q_network_forward.1']
    %7 = vsyncpa [#allocation3], 0
    // Predicated region
    $region2: #{q_network_forward.1} parent=1 // pred_check
      _
    $region3: #{q_network_forward.1} parent=1 // pred_check_branch
      %9 = sbr.rel (0) target = $region5
    $region4: #{q_network_forward.1} parent=1 // pred_region
      _
    $region5: #{q_network_forward.1} parent=1 // pred_fallthru
      _
    // Predicated region
    $region6: #{q_network_forward.1} parent=1 // pred_check
      _
    $region7: #{q_network_forward.1} parent=1 // pred_check_branch
      %11 = sbr.rel (0) target = $region9
    $region8: #{q_network_forward.1} parent=1 // pred_region
      %s13 = ssub.s32 6144, 6144
      %14 = vsyncadd [#allocation3], %s13
      %s15 = sshll.u32 [#allocation2], 4
      %s16 = int_to_ptr.vmem [resolvable:$true] %s15
      %21 = dma.hbm_to_vmem [thread:$0]  %s1, 6144, %s16, [#allocation3], 128, 128, 8
    $region9: #{q_network_forward.1} parent=1 // pred_fallthru
      _
    // Predicated region
    $region10: #{q_network_forward.1} parent=1 // pred_check
      _
    $region11: #{q_network_forward.1} parent=1 // pred_check_branch
      %23 = sbr.rel (0) target = $region13
    $region12: #{q_network_forward.1} parent=1 // pred_region
      %24 = dma.done [#allocation3], 6144
    $region13: #{q_network_forward.1} parent=1 // pred_fallthru
      _
    %v25 = vld [vmem:[%s0] sm:$0xff]
    %v26 = vld [vmem:[#allocation2] sm:$0xff]
    %v27 = vld [vmem:[#allocation2 + $0x7f] sm:$0x1]
    %v28 = vlaneseq
    %v29 = vshrl.u32 %v28, 7
    %v30 = vsub.s32 0, %v29
    %v31 = vrot.slane %v27, %v30
    %vm32 = vcmask 64512
    %v34 = vsel %vm32, %v25, 0
    %36 = vmatprep.subr.mxu0 0.0
    %37 = vmatpush1.msra.mxu0 %v26
    %38 = vmatprep.subr.mxu0 0.0
    %39 = vmatpush1.msra.mxu0 0.0
    %40 = vmatprep.subr.mxu0 0.0
    %41 = vmatpush1.msra.mxu0 0.0
    %42 = vmatprep.subr.mxu0 0.0
    %43 = vmatpush1.msra.mxu0 0.0
    %44 = vmatprep.subr.mxu0 0.0
    %45 = vmatpush1.msra.mxu0 0.0
    %46 = vmatprep.subr.mxu0 0.0
    %47 = vmatpush1.msra.mxu0 0.0
    %48 = vmatprep.subr.mxu0 0.0
    %49 = vmatpush1.msra.mxu0 0.0
    %50 = vmatprep.subr.mxu0 0.0
    %51 = vmatpush1.msra.mxu0 0.0
    %52 = vmatprep.subr.mxu0 0.0
    %53 = vmatpush1.msra.mxu0 0.0
    %54 = vmatprep.subr.mxu0 0.0
    %55 = vmatpush1.msra.mxu0 0.0
    %56 = vmatprep.subr.mxu0 0.0
    %57 = vmatpush1.msra.mxu0 0.0
    %58 = vmatprep.subr.mxu0 0.0
    %59 = vmatpush1.msra.mxu0 0.0
    %60 = vmatprep.subr.mxu0 0.0
    %61 = vmatpush1.msra.mxu0 0.0
    %62 = vmatprep.subr.mxu0 0.0
    %63 = vmatpush1.msra.mxu0 0.0
    %64 = vmatprep.subr.mxu0 0.0
    %65 = vmatpush1.msra.mxu0 0.0
    %66 = vmatprep.subr.mxu0 0.0
    %67 = vmatpush1.msra.mxu0 0.0
    %68 = vmatprep.subr.mxu0 0.0
    %69 = vmatpush1.msra.mxu0 0.0
    %70 = vmatprep.subr.mxu0 0.0
    %71 = vmatpush1.msra.mxu0 0.0
    %72 = vmatprep.subr.mxu0 0.0
    %73 = vmatpush1.msra.mxu0 0.0
    %74 = vmatprep.subr.mxu0 0.0
    %75 = vmatpush1.msra.mxu0 0.0
    %76 = vmatprep.subr.mxu0 0.0
    %77 = vmatpush1.msra.mxu0 0.0
    %78 = vmatprep.subr.mxu0 0.0
    %79 = vmatpush1.msra.mxu0 0.0
    %80 = vmatprep.subr.mxu0 0.0
    %81 = vmatpush1.msra.mxu0 0.0
    %82 = vmatprep.subr.mxu0 0.0
    %83 = vmatpush1.msra.mxu0 0.0
    %84 = vmatprep.subr.mxu0 0.0
    %85 = vmatpush1.msra.mxu0 0.0
    %86 = vmatprep.subr.mxu0 0.0
    %87 = vmatpush1.msra.mxu0 0.0
    %88 = vmatprep.subr.mxu0 0.0
    %89 = vmatpush1.msra.mxu0 0.0
    %90 = vmatprep.subr.mxu0 0.0
    %91 = vmatpush1.msra.mxu0 0.0
    %92 = vmatprep.subr.mxu0 0.0
    %93 = vmatpush1.msra.mxu0 0.0
    %94 = vmatprep.subr.mxu0 0.0
    %95 = vmatpush1.msra.mxu0 0.0
    %96 = vmatprep.subr.mxu0 0.0
    %97 = vmatpush1.msra.mxu0 0.0
    %98 = vmatprep.subr.mxu0 0.0
    %99 = vmatpush1.msra.mxu0 0.0
    %100 = vmatprep.mubr.f32.mxu0 0.0
    %101 = vmatmul.mubr.f32.gmra.mrb[0].mxu0 %v34
    %v102 = vpop.f32.mrb[0].mxu0
    %v103 = vadd.f32 %v31, %v102
    %v104 = vpop.f32.mrb[0].mxu0
    %105 = vdwg.mxu0
    %v106 = vmax.f32 %v103, 0.0
    %s107 = scalar_lea.vmem [#allocation2], 128
    %v108 = vld [vmem:[%s107] sm:$0xff]
    %v109 = vld [vmem:[%s107 + $0x8] sm:$0xff]
    %v110 = vld [vmem:[%s107 + $0x10] sm:$0xff]
    %v111 = vld [vmem:[%s107 + $0x18] sm:$0xff]
    %v112 = vld [vmem:[%s107 + $0x20] sm:$0xff]
    %v113 = vld [vmem:[%s107 + $0x28] sm:$0xff]
    %v114 = vld [vmem:[%s107 + $0x30] sm:$0xff]
    %v115 = vld [vmem:[%s107 + $0x38] sm:$0xff]
    %v116 = vld [vmem:[%s107 + $0x40] sm:$0xff]
    %v117 = vld [vmem:[%s107 + $0x48] sm:$0xff]
    %v118 = vld [vmem:[%s107 + $0x50] sm:$0xff]
    %v119 = vld [vmem:[%s107 + $0x58] sm:$0xff]
    %v120 = vld [vmem:[%s107 + $0x60] sm:$0xff]
    %v121 = vld [vmem:[%s107 + $0x68] sm:$0xff]
    %v122 = vld [vmem:[%s107 + $0x70] sm:$0xff]
    %v123 = vld [vmem:[%s107 + $0x78] sm:$0xff]
    %v124 = vld [vmem:[%s107 + $0x7f] sm:$0x1]
    %v125 = vlaneseq
    %v126 = vshrl.u32 %v125, 7
    %v127 = vsub.s32 0, %v126
    %v128 = vrot.slane %v124, %v127
    %129 = vmatprep.subr.mxu0 0.0
    %130 = vmatpush1.msra.mxu0 %v108
    %131 = vmatprep.subr.mxu0 0.0
    %132 = vmatpush1.msra.mxu0 %v109
    %133 = vmatprep.subr.mxu0 0.0
    %134 = vmatpush1.msra.mxu0 %v110
    %135 = vmatprep.subr.mxu0 0.0
    %136 = vmatpush1.msra.mxu0 %v111
    %137 = vmatprep.subr.mxu0 0.0
    %138 = vmatpush1.msra.mxu0 %v112
    %139 = vmatprep.subr.mxu0 0.0
    %140 = vmatpush1.msra.mxu0 %v113
    %141 = vmatprep.subr.mxu0 0.0
    %142 = vmatpush1.msra.mxu0 %v114
    %143 = vmatprep.subr.mxu0 0.0
    %144 = vmatpush1.msra.mxu0 %v115
    %145 = vmatprep.subr.mxu0 0.0
    %146 = vmatpush1.msra.mxu0 %v116
    %147 = vmatprep.subr.mxu0 0.0
    %148 = vmatpush1.msra.mxu0 %v117
    %149 = vmatprep.subr.mxu0 0.0
    %150 = vmatpush1.msra.mxu0 %v118
    %151 = vmatprep.subr.mxu0 0.0
    %152 = vmatpush1.msra.mxu0 %v119
    %153 = vmatprep.subr.mxu0 0.0
    %154 = vmatpush1.msra.mxu0 %v120
    %155 = vmatprep.subr.mxu0 0.0
    %156 = vmatpush1.msra.mxu0 %v121
    %157 = vmatprep.subr.mxu0 0.0
    %158 = vmatpush1.msra.mxu0 %v122
    %159 = vmatprep.subr.mxu0 0.0
    %160 = vmatpush1.msra.mxu0 %v123
    %161 = vmatprep.subr.mxu0 0.0
    %162 = vmatpush1.msra.mxu0 0.0
    %163 = vmatprep.subr.mxu0 0.0
    %164 = vmatpush1.msra.mxu0 0.0
    %165 = vmatprep.subr.mxu0 0.0
    %166 = vmatpush1.msra.mxu0 0.0
    %167 = vmatprep.subr.mxu0 0.0
    %168 = vmatpush1.msra.mxu0 0.0
    %169 = vmatprep.subr.mxu0 0.0
    %170 = vmatpush1.msra.mxu0 0.0
    %171 = vmatprep.subr.mxu0 0.0
    %172 = vmatpush1.msra.mxu0 0.0
    %173 = vmatprep.subr.mxu0 0.0
    %174 = vmatpush1.msra.mxu0 0.0
    %175 = vmatprep.subr.mxu0 0.0
    %176 = vmatpush1.msra.mxu0 0.0
    %177 = vmatprep.subr.mxu0 0.0
    %178 = vmatpush1.msra.mxu0 0.0
    %179 = vmatprep.subr.mxu0 0.0
    %180 = vmatpush1.msra.mxu0 0.0
    %181 = vmatprep.subr.mxu0 0.0
    %182 = vmatpush1.msra.mxu0 0.0
    %183 = vmatprep.subr.mxu0 0.0
    %184 = vmatpush1.msra.mxu0 0.0
    %185 = vmatprep.subr.mxu0 0.0
    %186 = vmatpush1.msra.mxu0 0.0
    %187 = vmatprep.subr.mxu0 0.0
    %188 = vmatpush1.msra.mxu0 0.0
    %189 = vmatprep.subr.mxu0 0.0
    %190 = vmatpush1.msra.mxu0 0.0
    %191 = vmatprep.subr.mxu0 0.0
    %192 = vmatpush1.msra.mxu0 0.0
    %193 = vmatprep.mubr.f32.mxu0 0.0
    %194 = vmatmul.mubr.f32.gmra.mrb[0].mxu0 %v106
    %v195 = vpop.f32.mrb[0].mxu0
    %v196 = vadd.f32 %v128, %v195
    %v197 = vpop.f32.mrb[0].mxu0
    %198 = vdwg.mxu0
    %v199 = vmax.f32 %v196, 0.0
    %s200 = scalar_lea.vmem [#allocation2], 256
    %v201 = vld [vmem:[%s200] sm:$0xff]
    %v202 = vld [vmem:[%s200 + $0x8] sm:$0xff]
    %v203 = vld [vmem:[%s200 + $0x10] sm:$0xff]
    %v204 = vld [vmem:[%s200 + $0x18] sm:$0xff]
    %v205 = vld [vmem:[%s200 + $0x20] sm:$0xff]
    %v206 = vld [vmem:[%s200 + $0x28] sm:$0xff]
    %v207 = vld [vmem:[%s200 + $0x30] sm:$0xff]
    %v208 = vld [vmem:[%s200 + $0x38] sm:$0xff]
    %v209 = vld [vmem:[%s200 + $0x40] sm:$0xff]
    %v210 = vld [vmem:[%s200 + $0x48] sm:$0xff]
    %v211 = vld [vmem:[%s200 + $0x50] sm:$0xff]
    %v212 = vld [vmem:[%s200 + $0x58] sm:$0xff]
    %v213 = vld [vmem:[%s200 + $0x60] sm:$0xff]
    %v214 = vld [vmem:[%s200 + $0x68] sm:$0xff]
    %v215 = vld [vmem:[%s200 + $0x70] sm:$0xff]
    %v216 = vld [vmem:[%s200 + $0x78] sm:$0xff]
    %v217 = vld [vmem:[%s200 + $0x7f] sm:$0x1]
    %v218 = vlaneseq
    %v219 = vshrl.u32 %v218, 7
    %v220 = vsub.s32 0, %v219
    %v221 = vrot.slane %v217, %v220
    %222 = vmatprep.subr.mxu0 0.0
    %223 = vmatpush1.msra.mxu0 %v201
    %224 = vmatprep.subr.mxu0 0.0
    %225 = vmatpush1.msra.mxu0 %v202
    %226 = vmatprep.subr.mxu0 0.0
    %227 = vmatpush1.msra.mxu0 %v203
    %228 = vmatprep.subr.mxu0 0.0
    %229 = vmatpush1.msra.mxu0 %v204
    %230 = vmatprep.subr.mxu0 0.0
    %231 = vmatpush1.msra.mxu0 %v205
    %232 = vmatprep.subr.mxu0 0.0
    %233 = vmatpush1.msra.mxu0 %v206
    %234 = vmatprep.subr.mxu0 0.0
    %235 = vmatpush1.msra.mxu0 %v207
    %236 = vmatprep.subr.mxu0 0.0
    %237 = vmatpush1.msra.mxu0 %v208
    %238 = vmatprep.subr.mxu0 0.0
    %239 = vmatpush1.msra.mxu0 %v209
    %240 = vmatprep.subr.mxu0 0.0
    %241 = vmatpush1.msra.mxu0 %v210
    %242 = vmatprep.subr.mxu0 0.0
    %243 = vmatpush1.msra.mxu0 %v211
    %244 = vmatprep.subr.mxu0 0.0
    %245 = vmatpush1.msra.mxu0 %v212
    %246 = vmatprep.subr.mxu0 0.0
    %247 = vmatpush1.msra.mxu0 %v213
    %248 = vmatprep.subr.mxu0 0.0
    %249 = vmatpush1.msra.mxu0 %v214
    %250 = vmatprep.subr.mxu0 0.0
    %251 = vmatpush1.msra.mxu0 %v215
    %252 = vmatprep.subr.mxu0 0.0
    %253 = vmatpush1.msra.mxu0 %v216
    %254 = vmatprep.subr.mxu0 0.0
    %255 = vmatpush1.msra.mxu0 0.0
    %256 = vmatprep.subr.mxu0 0.0
    %257 = vmatpush1.msra.mxu0 0.0
    %258 = vmatprep.subr.mxu0 0.0
    %259 = vmatpush1.msra.mxu0 0.0
    %260 = vmatprep.subr.mxu0 0.0
    %261 = vmatpush1.msra.mxu0 0.0
    %262 = vmatprep.subr.mxu0 0.0
    %263 = vmatpush1.msra.mxu0 0.0
    %264 = vmatprep.subr.mxu0 0.0
    %265 = vmatpush1.msra.mxu0 0.0
    %266 = vmatprep.subr.mxu0 0.0
    %267 = vmatpush1.msra.mxu0 0.0
    %268 = vmatprep.subr.mxu0 0.0
    %269 = vmatpush1.msra.mxu0 0.0
    %270 = vmatprep.subr.mxu0 0.0
    %271 = vmatpush1.msra.mxu0 0.0
    %272 = vmatprep.subr.mxu0 0.0
    %273 = vmatpush1.msra.mxu0 0.0
    %274 = vmatprep.subr.mxu0 0.0
    %275 = vmatpush1.msra.mxu0 0.0
    %276 = vmatprep.subr.mxu0 0.0
    %277 = vmatpush1.msra.mxu0 0.0
    %278 = vmatprep.subr.mxu0 0.0
    %279 = vmatpush1.msra.mxu0 0.0
    %280 = vmatprep.subr.mxu0 0.0
    %281 = vmatpush1.msra.mxu0 0.0
    %282 = vmatprep.subr.mxu0 0.0
    %283 = vmatpush1.msra.mxu0 0.0
    %284 = vmatprep.subr.mxu0 0.0
    %285 = vmatpush1.msra.mxu0 0.0
    %286 = vmatprep.mubr.f32.mxu0 0.0
    %287 = vmatmul.mubr.f32.gmra.mrb[0].mxu0 %v199
    %v288 = vpop.f32.mrb[0].mxu0
    %v289 = vadd.f32 %v221, %v288
    %v290 = vpop.f32.mrb[0].mxu0
    %291 = vdwg.mxu0
    %vm292 = vcmask 15360
    %293 = vst.msk [vmem:[%s2] sm:$0xff] %vm292, %v289
    // Predicated region
    $region14: #{q_network_forward.1} parent=1 // pred_check
      _
    $region15: #{q_network_forward.1} parent=1 // pred_check_branch
      %295 = sbr.rel (0) target = $region17
    $region16: #{q_network_forward.1} parent=1 // pred_region
      _
    $region17: #{q_network_forward.1} parent=1 // pred_fallthru
      _
    // Predicated region
    $region18: #{q_network_forward.1} parent=1 // pred_check
      _
    $region19: #{q_network_forward.1} parent=1 // pred_check_branch
      %297 = sbr.rel (0) target = $region21
    $region20: #{q_network_forward.1} parent=1 // pred_region
      _
    $region21: #{q_network_forward.1} parent=1 // pred_fallthru
      _
    %298 = vsyncpa [#allocation3], 1

</llo_original>
